<compile_context>
chip_gen: v7x
topology: tpu7x:2x2x1
jax: 0.10.0
libtpu: 0.0.40
codegen_flags: <defaults>
</compile_context>

<pallas_src>
import jax
import jax.numpy as jnp
from jax.experimental import pallas as pl
from jax.experimental.pallas import tpu as pltpu

_LANE = 128


def _round_up(v, m):
    return ((v + m - 1) // m) * m


def _qnet_kernel(x_ref, w1_ref, b1_ref, w2_ref, b2_ref, o_ref):
    # hidden = relu(x @ W1 + b1)   -- bf16 operands, f32 accumulate
    h = jnp.dot(x_ref[...], w1_ref[...], preferred_element_type=jnp.float32)
    h = jnp.maximum(h + b1_ref[...], 0.0)
    # out = h @ W2 + b2            -- cast h to bf16 for the MXU, f32 accumulate
    y = jnp.dot(h.astype(w2_ref.dtype), w2_ref[...],
                preferred_element_type=jnp.float32)
    o_ref[...] = (y + b2_ref[...]).astype(o_ref.dtype)


def qnet_forward(x, w1, b1, w2, b2, *, tile_b=256):
    """Fused 2-layer MLP forward pass (batched, tiled) in a single Pallas kernel.

    x : (B, in)    float32
    w1: (in, H)    float32   (PyTorch linear1.weight.T)
    b1: (1, H)     float32
    w2: (H, out)   float32   (PyTorch linear2.weight.T)
    b2: (1, out)   float32
    returns (B, out) float32
    """
    B, in_f = x.shape
    H = w1.shape[1]
    out_f = w2.shape[1]

    # --- pad features to lane-dense (128-wide) slabs; zero padding preserves
    #     semantics: relu(0) = 0 and zero W2 rows contribute nothing. ---
    H_p = _round_up(max(H, _LANE), _LANE)
    out_p = _round_up(max(out_f, _LANE), _LANE)

    w1_p = jnp.pad(w1, ((0, 0), (0, H_p - H))).astype(jnp.bfloat16)
    b1_p = jnp.pad(b1.reshape(1, H), ((0, 0), (0, H_p - H))).astype(jnp.float32)
    w2_p = jnp.pad(w2, ((0, H_p - H), (0, out_p - out_f))).astype(jnp.bfloat16)
    b2_p = jnp.pad(b2.reshape(1, out_f), ((0, 0), (0, out_p - out_f))).astype(jnp.float32)

    # --- batch tiling: pad B up to a multiple of the row tile. ---
    tile = _round_up(min(tile_b, _round_up(B, 8)), 8)
    B_pad = _round_up(B, tile)
    x_p = jnp.pad(x, ((0, B_pad - B), (0, 0))).astype(jnp.bfloat16)

    grid = (B_pad // tile,)
    vmem = pltpu.MemorySpace.VMEM

    out_padded = pl.pallas_call(
        _qnet_kernel,
        out_shape=jax.ShapeDtypeStruct((B_pad, out_p), jnp.float32),
        grid=grid,
        in_specs=[
            # x tile marches down the batch axis
            pl.BlockSpec((tile, in_f), lambda i: (i, 0), memory_space=vmem),
            # weights / biases: same block every step -> resident in VMEM
            pl.BlockSpec((in_f, H_p), lambda i: (0, 0), memory_space=vmem),
            pl.BlockSpec((1, H_p), lambda i: (0, 0), memory_space=vmem),
            pl.BlockSpec((H_p, out_p), lambda i: (0, 0), memory_space=vmem),
            pl.BlockSpec((1, out_p), lambda i: (0, 0), memory_space=vmem),
        ],
        out_specs=pl.BlockSpec((tile, out_p), lambda i: (i, 0), memory_space=vmem),
        compiler_params=pltpu.CompilerParams(
            dimension_semantics=("parallel",)),
    )(x_p, w1_p, b1_p, w2_p, b2_p)

    return out_padded[:B, :out_f]


def init_qnet_params(key, input_size, hidden_size, output_size):
    """Deterministic init mimicking PyTorch nn.Linear default (U[-1/sqrt(fan_in), 1/sqrt(fan_in)])."""
    k1, k2, k3, k4 = jax.random.split(key, 4)
    bound1 = 1.0 / jnp.sqrt(jnp.float32(input_size))
    bound2 = 1.0 / jnp.sqrt(jnp.float32(hidden_size))
    w1 = jax.random.uniform(k1, (input_size, hidden_size), jnp.float32, -bound1, bound1)
    b1 = jax.random.uniform(k2, (1, hidden_size), jnp.float32, -bound1, bound1)
    w2 = jax.random.uniform(k3, (hidden_size, output_size), jnp.float32, -bound2, bound2)
    b2 = jax.random.uniform(k4, (1, output_size), jnp.float32, -bound2, bound2)
    return w1, b1, w2, b2


def _reference_bf16_matched(x, w1, b1, w2, b2):
    """Pure-JAX reference replicating the kernel's bf16-operand / f32-accum math."""
    hp = jax.lax.Precision.HIGHEST
    xb = x.astype(jnp.bfloat16).astype(jnp.float32)
    w1b = w1.astype(jnp.bfloat16).astype(jnp.float32)
    w2b = w2.astype(jnp.bfloat16).astype(jnp.float32)
    h = jnp.maximum(jnp.dot(xb, w1b, precision=hp) + b1, 0.0)
    hb = h.astype(jnp.bfloat16).astype(jnp.float32)
    return jnp.dot(hb, w2b, precision=hp) + b2


def _reference_f32(x, w1, b1, w2, b2):
    """Exact PyTorch-semantics reference in f32 (loose-tolerance sanity check)."""
    hp = jax.lax.Precision.HIGHEST
    h = jnp.maximum(jnp.dot(x, w1, precision=hp) + b1, 0.0)
    return jnp.dot(h, w2, precision=hp) + b2


if __name__ == "__main__":
    # Q-network-sized problem: input=16, hidden=32, output=4.
    # Batch 512 (many RL states per call) exercises the 2-step batch grid;
    # still tiny in absolute terms.
    input_size, hidden_size, output_size = 16, 32, 4

    key = jax.random.PRNGKey(0)
    kx, kp = jax.random.split(key)
    w1, b1, w2, b2 = init_qnet_params(kp, input_size, hidden_size, output_size)

    ok = True
    for batch in (512, 37):  # divisible and non-divisible batch sizes
        x = jax.random.normal(jax.random.fold_in(kx, batch),
                              (batch, input_size), jnp.float32)

        out = qnet_forward(x, w1, b1, w2, b2)
        out = jax.block_until_ready(out)
        assert out.shape == (batch, output_size)

        ref_matched = _reference_bf16_matched(x, w1, b1, w2, b2)
        ref_f32 = _reference_f32(x, w1, b1, w2, b2)
        ok &= bool(jnp.allclose(out, ref_matched, atol=1e-3, rtol=1e-3))
        ok &= bool(jnp.allclose(out, ref_f32, atol=1e-1, rtol=1e-1))

    assert ok
    print("KERNEL_OK")
</pallas_src>

<mosaic_0001>
module attributes {stable_mosaic.version = 11 : i64} {
  func.func @_qnet_kernel(%arg0: i32, %arg1: memref<256x16xbf16, #tpu.memory_space<vmem>>, %arg2: memref<16x128xbf16, #tpu.memory_space<vmem>>, %arg3: memref<1x128xf32, #tpu.memory_space<vmem>>, %arg4: memref<128x128xbf16, #tpu.memory_space<vmem>>, %arg5: memref<1x128xf32, #tpu.memory_space<vmem>>, %arg6: memref<256x128xf32, #tpu.memory_space<vmem>>) attributes {dimension_semantics = [#tpu.dimension_semantics<parallel>], iteration_bounds = array<i64: 2>, scalar_prefetch = 0 : i64, scratch_operands = 0 : i64, tpu.core_type = #tpu.core_type<tc>, window_params = [{transform_indices = @transform_0, window_bounds = array<i64: 256, 16>}, {pipeline_mode = #tpu.pipeline_mode<synchronous>, transform_indices = @transform_1, window_bounds = array<i64: 16, 128>}, {pipeline_mode = #tpu.pipeline_mode<synchronous>, transform_indices = @transform_2, window_bounds = array<i64: 1, 128>}, {pipeline_mode = #tpu.pipeline_mode<synchronous>, transform_indices = @transform_3, window_bounds = array<i64: 128, 128>}, {pipeline_mode = #tpu.pipeline_mode<synchronous>, transform_indices = @transform_4, window_bounds = array<i64: 1, 128>}, {transform_indices = @transform_5, window_bounds = array<i64: 256, 128>}]} {
    %c0 = arith.constant 0 : index
    %c0_0 = arith.constant 0 : index
    %0 = vector.load %arg1[%c0, %c0_0] : memref<256x16xbf16, #tpu.memory_space<vmem>>, vector<256x16xbf16>
    %c0_1 = arith.constant 0 : index
    %c0_2 = arith.constant 0 : index
    %1 = vector.load %arg2[%c0_1, %c0_2] : memref<16x128xbf16, #tpu.memory_space<vmem>>, vector<16x128xbf16>
    %cst = arith.constant dense<0.000000e+00> : vector<256x128xf32>
    %2 = tpu.matmul %0, %1, %cst {dimension_numbers = #tpu.dot_dimension_numbers<[1], [0], [0], [1], [0, 0, 1, 1], [], []>} : vector<256x16xbf16>, vector<16x128xbf16>, vector<256x128xf32> -> vector<256x128xf32>
    %c0_3 = arith.constant 0 : index
    %c0_4 = arith.constant 0 : index
    %3 = vector.load %arg3[%c0_3, %c0_4] : memref<1x128xf32, #tpu.memory_space<vmem>>, vector<1x128xf32>
    %4 = vector.broadcast %3 : vector<1x128xf32> to vector<256x128xf32>
    %5 = arith.addf %2, %4 : vector<256x128xf32>
    %cst_5 = arith.constant 0.000000e+00 : f32
    %6 = vector.broadcast %cst_5 : f32 to vector<256x128xf32>
    %7 = arith.maximumf %5, %6 : vector<256x128xf32>
    %8 = arith.truncf %7 : vector<256x128xf32> to vector<256x128xbf16>
    %c0_6 = arith.constant 0 : index
    %c0_7 = arith.constant 0 : index
    %9 = vector.load %arg4[%c0_6, %c0_7] : memref<128x128xbf16, #tpu.memory_space<vmem>>, vector<128x128xbf16>
    %cst_8 = arith.constant dense<0.000000e+00> : vector<256x128xf32>
    %10 = tpu.matmul %8, %9, %cst_8 {dimension_numbers = #tpu.dot_dimension_numbers<[1], [0], [0], [1], [0, 0, 1, 1], [], []>} : vector<256x128xbf16>, vector<128x128xbf16>, vector<256x128xf32> -> vector<256x128xf32>
    %c0_9 = arith.constant 0 : index
    %c0_10 = arith.constant 0 : index
    %11 = vector.load %arg5[%c0_9, %c0_10] : memref<1x128xf32, #tpu.memory_space<vmem>>, vector<1x128xf32>
    %12 = vector.broadcast %11 : vector<1x128xf32> to vector<256x128xf32>
    %13 = arith.addf %10, %12 : vector<256x128xf32>
    %c0_11 = arith.constant 0 : index
    %c0_12 = arith.constant 0 : index
    %14 = vector.load %arg6[%c0_11, %c0_12] : memref<256x128xf32, #tpu.memory_space<vmem>>, vector<256x128xf32>
    tpu.vector_store %arg6[%c0_11, %c0_12], %13 {strides = array<i32>} : memref<256x128xf32, #tpu.memory_space<vmem>>, vector<256x128xf32>,
    return
  }
  func.func @transform_0(%arg0: i32) -> (i32, i32) {
    %c0_i32 = arith.constant 0 : i32
    %c0_i32_0 = arith.constant 0 : i32
    return %arg0, %c0_i32 : i32, i32
  }
  func.func @transform_1(%arg0: i32) -> (i32, i32) {
    %c0_i32 = arith.constant 0 : i32
    %c0_i32_0 = arith.constant 0 : i32
    %c0_i32_1 = arith.constant 0 : i32
    return %c0_i32, %c0_i32_0 : i32, i32
  }
  func.func @transform_2(%arg0: i32) -> (i32, i32) {
    %c0_i32 = arith.constant 0 : i32
    %c0_i32_0 = arith.constant 0 : i32
    %c0_i32_1 = arith.constant 0 : i32
    return %c0_i32, %c0_i32_0 : i32, i32
  }
  func.func @transform_3(%arg0: i32) -> (i32, i32) {
    %c0_i32 = arith.constant 0 : i32
    %c0_i32_0 = arith.constant 0 : i32
    %c0_i32_1 = arith.constant 0 : i32
    return %c0_i32, %c0_i32_0 : i32, i32
  }
  func.func @transform_4(%arg0: i32) -> (i32, i32) {
    %c0_i32 = arith.constant 0 : i32
    %c0_i32_0 = arith.constant 0 : i32
    %c0_i32_1 = arith.constant 0 : i32
    return %c0_i32, %c0_i32_0 : i32, i32
  }
  func.func @transform_5(%arg0: i32) -> (i32, i32) {
    %c0_i32 = arith.constant 0 : i32
    %c0_i32_0 = arith.constant 0 : i32
    return %arg0, %c0_i32 : i32, i32
  }
}

</mosaic_0001>

<llo_original>
// kernel: tpu_custom_call.1
$region0: #{tpu_custom_call.1}
  #allocation0 [shape = 'u32[]', space=smem, size = 0x4, offset = 0x4, fixed_abs, tag = 'smem constant byte address 0x4 - core index']
  #allocation1 [shape = 'u32[144,128]{1,0:T(1,128)}', space=vmem, size = 0x12000, scoped, tag = 'internal scratch']
  %s0 = inlined_call_operand.vmem [shape: bf16[512,16], index: 0, kind: input, shape index: {}]
  %s1 = inlined_call_operand.vmem [shape: bf16[16,128], index: 1, kind: input, shape index: {}]
  %s2 = inlined_call_operand.vmem [shape: f32[1,128], index: 2, kind: input, shape index: {}]
  %s3 = inlined_call_operand.vmem [shape: bf16[128,128], index: 3, kind: input, shape index: {}]
  %s4 = inlined_call_operand.vmem [shape: f32[1,128], index: 4, kind: input, shape index: {}]
  %s5 = inlined_call_operand.hbm [shape: f32[512,128], index: 5, kind: output, shape index: {}]
  %s6 = sld [smem:[#allocation0]]
  $region53: #{tpu_custom_call.1} parent=0
    _
  %s8 = ssub.s32 1, %s6
  %s9 = scalar_select 0, %s8, %s6
  $region1: #{tpu_custom_call.1} parent=0
    #allocation2 [shape = 'u8[262144]{0}', space=vmem, size = 0x40000, scoped, tag = 'output window, operand 0']
    #allocation3 [shape = 's32[2]{0}', space=sflag, size = 0x8, scoped, tag = 'scoped memory for tpu_custom_call.1']
    %10 = vsyncpa [#allocation3], 0
    %s11 = scalar_lea.sflag [#allocation3], 1
    %12 = vsyncpa %s11, 0
    loop: start=0, step=1, limit=4
    $region2: #{tpu_custom_call.1} parent=1 // loop_pre_header
      _
    $region3: #{tpu_custom_call.1} parent=1 // loop_header
      %s14 = sphi 0, %s18
      %p15 = scmp.ge.s32.totalorder %s14, 4
      %s24 = sphi 0, %s26
      %s27 = sphi 0, %s24
      %s28 = sphi 0, %s27
      %s44 = sphi 0, %s28
      %s48 = sphi 0, %s48
      %s50 = sphi 0, %s48
      %s51 = sphi 0, %s50
      %s65 = sphi 0, %s51
      %s69 = sphi 0, %s69
      %s71 = sphi 0, %s69
      %s72 = sphi 0, %s71
      %s86 = sphi 0, %s72
      %s90 = sphi 0, %s90
      %s92 = sphi 0, %s90
      %s93 = sphi 0, %s92
      %s107 = sphi 0, %s93
      %s111 = sphi 0, %s111
      %s113 = sphi 0, %s111
      %s114 = sphi 0, %s113
      %s128 = sphi 0, %s114
      %s134 = sphi 0, %s136
      %s137 = sphi 0, %s134
      %s138 = sphi 0, %s137
      %s154 = sphi 0, %s138
    $region4: #{tpu_custom_call.1} parent=1 // loop_header_branch
      %17 = sbr.rel (%p15) target = $region8
    $region5: #{tpu_custom_call.1} parent=1 // loop_body
      %s19 = ssub.s32 %s14, 1
      %s20 = ssub.s32 %s14, 2
      %s21 = sadd.s32 %s14, 1
      %s22 = ssub.s32 %s14, %s21
      %p23 = scmp.eq.s32.totalorder %s22, 0
      %s25 = sadd.s32 %s24, 1
      %s26 = scalar_select %p23, %s24, %s25
      %p29 = pneg %p23
      %p30 = scmp.eq.s32.totalorder %s14, 1
      %p31 = por %p29, %p30
      %p32 = scmp.ne.s32.totalorder %s24, %s27
      %p33 = scmp.eq.s32.totalorder %s14, 0
      %p34 = por %p32, %p33
      %p35 = scmp.ne.s32.totalorder %s24, %s27
      %p36 = scmp.eq.s32.totalorder %s19, 1
      %p37 = por %p35, %p36
      %p38 = scmp.ne.s32.totalorder %s27, %s28
      %p39 = scmp.eq.s32.totalorder %s19, 0
      %p40 = por %p38, %p39
      %p41 = scmp.ne.s32.totalorder %s27, %s28
      %p42 = scmp.eq.s32.totalorder %s20, 1
      %p43 = por %p41, %p42
      %p45 = scmp.ne.s32.totalorder %s28, %s44
      %p46 = scmp.eq.s32.totalorder %s20, 0
      %p47 = por %p45, %p46
      %s49 = sadd.s32 %s48, 1
      %p52 = scmp.eq.s32.totalorder %s14, 1
      %p53 = scmp.ne.s32.totalorder %s48, %s50
      %p54 = scmp.eq.s32.totalorder %s14, 0
      %p55 = por %p53, %p54
      %p56 = scmp.ne.s32.totalorder %s48, %s50
      %p57 = scmp.eq.s32.totalorder %s19, 1
      %p58 = por %p56, %p57
      %p59 = scmp.ne.s32.totalorder %s50, %s51
      %p60 = scmp.eq.s32.totalorder %s19, 0
      %p61 = por %p59, %p60
      %p62 = scmp.ne.s32.totalorder %s50, %s51
      %p63 = scmp.eq.s32.totalorder %s20, 1
      %p64 = por %p62, %p63
      %p66 = scmp.ne.s32.totalorder %s51, %s65
      %p67 = scmp.eq.s32.totalorder %s20, 0
      %p68 = por %p66, %p67
      %s70 = sadd.s32 %s69, 1
      %p73 = scmp.eq.s32.totalorder %s14, 1
      %p74 = scmp.ne.s32.totalorder %s69, %s71
      %p75 = scmp.eq.s32.totalorder %s14, 0
      %p76 = por %p74, %p75
      %p77 = scmp.ne.s32.totalorder %s69, %s71
      %p78 = scmp.eq.s32.totalorder %s19, 1
      %p79 = por %p77, %p78
      %p80 = scmp.ne.s32.totalorder %s71, %s72
      %p81 = scmp.eq.s32.totalorder %s19, 0
      %p82 = por %p80, %p81
      %p83 = scmp.ne.s32.totalorder %s71, %s72
      %p84 = scmp.eq.s32.totalorder %s20, 1
      %p85 = por %p83, %p84
      %p87 = scmp.ne.s32.totalorder %s72, %s86
      %p88 = scmp.eq.s32.totalorder %s20, 0
      %p89 = por %p87, %p88
      %s91 = sadd.s32 %s90, 1
      %p94 = scmp.eq.s32.totalorder %s14, 1
      %p95 = scmp.ne.s32.totalorder %s90, %s92
      %p96 = scmp.eq.s32.totalorder %s14, 0
      %p97 = por %p95, %p96
      %p98 = scmp.ne.s32.totalorder %s90, %s92
      %p99 = scmp.eq.s32.totalorder %s19, 1
      %p100 = por %p98, %p99
      %p101 = scmp.ne.s32.totalorder %s92, %s93
      %p102 = scmp.eq.s32.totalorder %s19, 0
      %p103 = por %p101, %p102
      %p104 = scmp.ne.s32.totalorder %s92, %s93
      %p105 = scmp.eq.s32.totalorder %s20, 1
      %p106 = por %p104, %p105
      %p108 = scmp.ne.s32.totalorder %s93, %s107
      %p109 = scmp.eq.s32.totalorder %s20, 0
      %p110 = por %p108, %p109
      %s112 = sadd.s32 %s111, 1
      %p115 = scmp.eq.s32.totalorder %s14, 1
      %p116 = scmp.ne.s32.totalorder %s111, %s113
      %p117 = scmp.eq.s32.totalorder %s14, 0
      %p118 = por %p116, %p117
      %p119 = scmp.ne.s32.totalorder %s111, %s113
      %p120 = scmp.eq.s32.totalorder %s19, 1
      %p121 = por %p119, %p120
      %p122 = scmp.ne.s32.totalorder %s113, %s114
      %p123 = scmp.eq.s32.totalorder %s19, 0
      %p124 = por %p122, %p123
      %p125 = scmp.ne.s32.totalorder %s113, %s114
      %p126 = scmp.eq.s32.totalorder %s20, 1
      %p127 = por %p125, %p126
      %p129 = scmp.ne.s32.totalorder %s114, %s128
      %p130 = scmp.eq.s32.totalorder %s20, 0
      %p131 = por %p129, %p130
      %s132 = ssub.s32 %s14, %s21
      %p133 = scmp.eq.s32.totalorder %s132, 0
      %s135 = sadd.s32 %s134, 1
      %s136 = scalar_select %p133, %s134, %s135
      %p139 = pneg %p133
      %p140 = scmp.eq.s32.totalorder %s14, 1
      %p141 = por %p139, %p140
      %p142 = scmp.ne.s32.totalorder %s134, %s137
      %p143 = scmp.eq.s32.totalorder %s14, 0
      %p144 = por %p142, %p143
      %p145 = scmp.ne.s32.totalorder %s134, %s137
      %p146 = scmp.eq.s32.totalorder %s19, 1
      %p147 = por %p145, %p146
      %p148 = scmp.ne.s32.totalorder %s137, %s138
      %p149 = scmp.eq.s32.totalorder %s19, 0
      %p150 = por %p148, %p149
      %p151 = scmp.ne.s32.totalorder %s137, %s138
      %p152 = scmp.eq.s32.totalorder %s20, 1
      %p153 = por %p151, %p152
      %p155 = scmp.ne.s32.totalorder %s138, %s154
      %p156 = scmp.eq.s32.totalorder %s20, 0
      %p157 = por %p155, %p156
      %p158 = scmp.le.s32.totalorder 1, %s14
      %p159 = scmp.lt.s32.totalorder %s14, 3
      %p160 = pnand %p158, %p159
      %p161 = pneg %p160
      // Predicated region
      $region9: #{tpu_custom_call.1} parent=5 // pred_check
        _
      $region10: #{tpu_custom_call.1} parent=5 // pred_check_branch
        %163 = sbr.rel (%p160) target = $region12
      $region11: #{tpu_custom_call.1} parent=5 // pred_region
        %s164 = ssub.s32 %s14, 1
        // Predicated region
        $region13: #{tpu_custom_call.1} parent=11 // pred_check
          %p165 = pneg %p61
        $region14: #{tpu_custom_call.1} parent=11 // pred_check_branch
          %167 = sbr.rel (%p165) target = $region16
        $region15: #{tpu_custom_call.1} parent=11 // pred_region
          _
        $region16: #{tpu_custom_call.1} parent=11 // pred_fallthru
          _
        // Predicated region
        $region17: #{tpu_custom_call.1} parent=11 // pred_check
          %p168 = pneg %p82
        $region18: #{tpu_custom_call.1} parent=11 // pred_check_branch
          %170 = sbr.rel (%p168) target = $region20
        $region19: #{tpu_custom_call.1} parent=11 // pred_region
          _
        $region20: #{tpu_custom_call.1} parent=11 // pred_fallthru
          _
        // Predicated region
        $region21: #{tpu_custom_call.1} parent=11 // pred_check
          %p171 = pneg %p103
        $region22: #{tpu_custom_call.1} parent=11 // pred_check_branch
          %173 = sbr.rel (%p171) target = $region24
        $region23: #{tpu_custom_call.1} parent=11 // pred_region
          _
        $region24: #{tpu_custom_call.1} parent=11 // pred_fallthru
          _
        // Predicated region
        $region25: #{tpu_custom_call.1} parent=11 // pred_check
          %p174 = pneg %p124
        $region26: #{tpu_custom_call.1} parent=11 // pred_check_branch
          %176 = sbr.rel (%p174) target = $region28
        $region27: #{tpu_custom_call.1} parent=11 // pred_region
          _
        $region28: #{tpu_custom_call.1} parent=11 // pred_fallthru
          _
      $region12: #{tpu_custom_call.1} parent=5 // pred_fallthru
        _
      %p177 = scmp.lt.s32.totalorder %s14, 2
      // Predicated region
      $region29: #{tpu_custom_call.1} parent=5 // pred_check
        %p178 = pneg %p177
      $region30: #{tpu_custom_call.1} parent=5 // pred_check_branch
        %180 = sbr.rel (%p178) target = $region32
      $region31: #{tpu_custom_call.1} parent=5 // pred_region
        // Predicated region
        $region33: #{tpu_custom_call.1} parent=31 // pred_check
          %p181 = pneg %p34
        $region34: #{tpu_custom_call.1} parent=31 // pred_check_branch
          %183 = sbr.rel (%p181) target = $region36
        $region35: #{tpu_custom_call.1} parent=31 // pred_region
          %s184 = smul.u32 32, %s14
          %p185 = scmp.lt.s32.totalorder %s184, 63
          %s186 = scalar_select %p185, %s184, 63
          %s187 = smul.addr %s186, 4
          %s188 = scalar_lea.vmem %s0, %s187
          %s189 = smul.u32 32, %s14
        $region36: #{tpu_custom_call.1} parent=31 // pred_fallthru
          _
      $region32: #{tpu_custom_call.1} parent=5 // pred_fallthru
        _
      %p190 = scmp.le.s32.totalorder 1, %s14
      %p191 = scmp.lt.s32.totalorder %s14, 3
      %p192 = pnand %p190, %p191
      %p193 = pneg %p192
      // Predicated region
      $region37: #{tpu_custom_call.1} parent=5 // pred_check
        _
      $region38: #{tpu_custom_call.1} parent=5 // pred_check_branch
        %195 = sbr.rel (%p192) target = $region40
      $region39: #{tpu_custom_call.1} parent=5 // pred_region
        %s196 = ssub.s32 %s14, 1
        %s197 = smul.u32 32, %s19
        %p198 = scmp.lt.s32.totalorder %s197, 63
        %s199 = scalar_select %p198, %s197, 63
        %s200 = smul.addr %s199, 4
        %s201 = scalar_lea.vmem %s0, %s200
        %p202 = pneg %p40
        %p203 = pneg %p37
        %p204 = pneg %p61
        %p205 = pneg %p58
        %p206 = pneg %p82
        %p207 = pneg %p79
        %p208 = pneg %p103
        %p209 = pneg %p100
        %p210 = pneg %p124
        %p211 = pneg %p121
        %p212 = pneg %p150
        %p213 = pneg %p147
        %s214 = sand.u32 %s137, 1
        %s215 = scalar_lea.sflag [#allocation3], %s214
        %s216 = sand.u32 %s137, 1
        %s217 = smul.addr %s216, 256
        %s218 = scalar_lea.vmem [#allocation2], %s217
        %s219 = smul.u32 32, %s19
        %p220 = scmp.lt.s32.totalorder %s219, 63
        %s221 = scalar_select %p220, %s219, 63
        %s222 = smul.addr %s221, 4
        %s223 = scalar_lea.vmem %s0, %s222
        %s224 = smul.u32 32, %s19
        %s225 = smul.u32 32, %s19
        %v227 = vld [vmem:[%s223] sm:$0xf]
        %v228 = vld [vmem:[%s223 + $0x4] sm:$0xf]
        %v229 = vld [vmem:[%s223 + $0x8] sm:$0xf]
        %v230 = vld [vmem:[%s223 + $0xc] sm:$0xf]
        %v231 = vld [vmem:[%s223 + $0x10] sm:$0xf]
        %v232 = vld [vmem:[%s223 + $0x14] sm:$0xf]
        %v233 = vld [vmem:[%s223 + $0x18] sm:$0xf]
        %v234 = vld [vmem:[%s223 + $0x1c] sm:$0xf]
        %v235 = vld [vmem:[%s223 + $0x20] sm:$0xf]
        %v236 = vld [vmem:[%s223 + $0x24] sm:$0xf]
        %v237 = vld [vmem:[%s223 + $0x28] sm:$0xf]
        %v238 = vld [vmem:[%s223 + $0x2c] sm:$0xf]
        %v239 = vld [vmem:[%s223 + $0x30] sm:$0xf]
        %v240 = vld [vmem:[%s223 + $0x34] sm:$0xf]
        %v241 = vld [vmem:[%s223 + $0x38] sm:$0xf]
        %v242 = vld [vmem:[%s223 + $0x3c] sm:$0xf]
        %v243 = vld [vmem:[%s223 + $0x40] sm:$0xf]
        %v244 = vld [vmem:[%s223 + $0x44] sm:$0xf]
        %v245 = vld [vmem:[%s223 + $0x48] sm:$0xf]
        %v246 = vld [vmem:[%s223 + $0x4c] sm:$0xf]
        %v247 = vld [vmem:[%s223 + $0x50] sm:$0xf]
        %v248 = vld [vmem:[%s223 + $0x54] sm:$0xf]
        %v249 = vld [vmem:[%s223 + $0x58] sm:$0xf]
        %v250 = vld [vmem:[%s223 + $0x5c] sm:$0xf]
        %v251 = vld [vmem:[%s223 + $0x60] sm:$0xf]
        %v252 = vld [vmem:[%s223 + $0x64] sm:$0xf]
        %v253 = vld [vmem:[%s223 + $0x68] sm:$0xf]
        %v254 = vld [vmem:[%s223 + $0x6c] sm:$0xf]
        %v255 = vld [vmem:[%s223 + $0x70] sm:$0xf]
        %v256 = vld [vmem:[%s223 + $0x74] sm:$0xf]
        %v257 = vld [vmem:[%s223 + $0x78] sm:$0xf]
        %v258 = vld [vmem:[%s223 + $0x7c] sm:$0xf]
        %v259 = vld [vmem:[%s1] sm:$0xf]
        %v260 = vld [vmem:[%s1 + $0x4] sm:$0xf]
        %v261 = vld [vmem:[%s2] sm:$0x1]
        %v263 = vlaneseq
        %v264 = vshrl.u32 %v263, 7
        %v265 = vsub.s32 0, %v264
        %v266 = vrot.slane %v261, %v265
        %v300 = vunpack.c.l.b16 %v227
        %v301 = vunpack.c.l.b16 %v228
        %v302 = vunpack.c.l.b16 %v229
        %v303 = vunpack.c.l.b16 %v230
        %v304 = vunpack.c.l.b16 %v231
        %v305 = vunpack.c.l.b16 %v232
        %v306 = vunpack.c.l.b16 %v233
        %v307 = vunpack.c.l.b16 %v234
        %v308 = vunpack.c.l.b16 %v235
        %v309 = vunpack.c.l.b16 %v236
        %v310 = vunpack.c.l.b16 %v237
        %v311 = vunpack.c.l.b16 %v238
        %v312 = vunpack.c.l.b16 %v239
        %v313 = vunpack.c.l.b16 %v240
        %v314 = vunpack.c.l.b16 %v241
        %v315 = vunpack.c.l.b16 %v242
        %v316 = vunpack.c.l.b16 %v243
        %v317 = vunpack.c.l.b16 %v244
        %v318 = vunpack.c.l.b16 %v245
        %v319 = vunpack.c.l.b16 %v246
        %v320 = vunpack.c.l.b16 %v247
        %v321 = vunpack.c.l.b16 %v248
        %v322 = vunpack.c.l.b16 %v249
        %v323 = vunpack.c.l.b16 %v250
        %v324 = vunpack.c.l.b16 %v251
        %v325 = vunpack.c.l.b16 %v252
        %v326 = vunpack.c.l.b16 %v253
        %v327 = vunpack.c.l.b16 %v254
        %v328 = vunpack.c.l.b16 %v255
        %v329 = vunpack.c.l.b16 %v256
        %v330 = vunpack.c.l.b16 %v257
        %v331 = vunpack.c.l.b16 %v258
        %v332 = vpack.c.b16 %v301, %v300
        %v333 = vpack.c.b16 %v303, %v302
        %v334 = vpack.c.b16 %v305, %v304
        %v335 = vpack.c.b16 %v307, %v306
        %v336 = vpack.c.b16 %v309, %v308
        %v337 = vpack.c.b16 %v311, %v310
        %v338 = vpack.c.b16 %v313, %v312
        %v339 = vpack.c.b16 %v315, %v314
        %v340 = vpack.c.b16 %v317, %v316
        %v341 = vpack.c.b16 %v319, %v318
        %v342 = vpack.c.b16 %v321, %v320
        %v343 = vpack.c.b16 %v323, %v322
        %v344 = vpack.c.b16 %v325, %v324
        %v345 = vpack.c.b16 %v327, %v326
        %v346 = vpack.c.b16 %v329, %v328
        %v347 = vpack.c.b16 %v331, %v330
        %v350 = vunpack.c.l.b16 %v259
        %v351 = vunpack.c.l.b16 %v260
        %v352 = vpack.c.b16 %v351, %v350
        %vm354 = vcmask 130048
        %v356 = vsel %vm354, %v332, 0
        %v359 = vsel %vm354, %v333, 0
        %v362 = vsel %vm354, %v334, 0
        %v365 = vsel %vm354, %v335, 0
        %v368 = vsel %vm354, %v336, 0
        %v371 = vsel %vm354, %v337, 0
        %v374 = vsel %vm354, %v338, 0
        %v377 = vsel %vm354, %v339, 0
        %v380 = vsel %vm354, %v340, 0
        %v383 = vsel %vm354, %v341, 0
        %v386 = vsel %vm354, %v342, 0
        %v389 = vsel %vm354, %v343, 0
        %v392 = vsel %vm354, %v344, 0
        %v395 = vsel %vm354, %v345, 0
        %v398 = vsel %vm354, %v346, 0
        %v401 = vsel %vm354, %v347, 0
        %403 = vmatprep.subr.bf16.mxu0 0
        %404 = vmatpush1.bf16.msra.mxu0 %v352
        %405 = vmatprep.subr.bf16.mxu0 0
        %406 = vmatpush1.bf16.msra.mxu0 0
        %407 = vmatprep.subr.bf16.mxu0 0
        %408 = vmatpush1.bf16.msra.mxu0 0
        %409 = vmatprep.subr.bf16.mxu0 0
        %410 = vmatpush1.bf16.msra.mxu0 0
        %411 = vmatprep.subr.bf16.mxu0 0
        %412 = vmatpush1.bf16.msra.mxu0 0
        %413 = vmatprep.subr.bf16.mxu0 0
        %414 = vmatpush1.bf16.msra.mxu0 0
        %415 = vmatprep.subr.bf16.mxu0 0
        %416 = vmatpush1.bf16.msra.mxu0 0
        %417 = vmatprep.subr.bf16.mxu0 0
        %418 = vmatpush1.bf16.msra.mxu0 0
        %419 = vmatprep.subr.bf16.mxu0 0
        %420 = vmatpush1.bf16.msra.mxu0 0
        %421 = vmatprep.subr.bf16.mxu0 0
        %422 = vmatpush1.bf16.msra.mxu0 0
        %423 = vmatprep.subr.bf16.mxu0 0
        %424 = vmatpush1.bf16.msra.mxu0 0
        %425 = vmatprep.subr.bf16.mxu0 0
        %426 = vmatpush1.bf16.msra.mxu0 0
        %427 = vmatprep.subr.bf16.mxu0 0
        %428 = vmatpush1.bf16.msra.mxu0 0
        %429 = vmatprep.subr.bf16.mxu0 0
        %430 = vmatpush1.bf16.msra.mxu0 0
        %431 = vmatprep.subr.bf16.mxu0 0
        %432 = vmatpush1.bf16.msra.mxu0 0
        %433 = vmatprep.subr.bf16.mxu0 0
        %434 = vmatpush1.bf16.msra.mxu0 0
        %435 = vmatprep.mubr.bf16.mxu0 0
        %436 = vmatmul.mubr.bf16.gmra.mrb[0].mxu0 %v356
        %v437 = vpop.f32.mrb[0].mxu0
        %v438 = vadd.f32 %v266, %v437
        %v439 = vpop.f32.mrb[0].mxu0
        %v440 = vpop.f32.mrb[0].mxu0
        %v441 = vadd.f32 %v266, %v440
        %v442 = vpop.f32.mrb[0].mxu0
        %443 = vmatprep.mubr.bf16.mxu0 0
        %444 = vmatmul.mubr.bf16.gmra.mrb[0].mxu0 %v359
        %v445 = vpop.f32.mrb[0].mxu0
        %v446 = vadd.f32 %v266, %v445
        %v447 = vpop.f32.mrb[0].mxu0
        %v448 = vpop.f32.mrb[0].mxu0
        %v449 = vadd.f32 %v266, %v448
        %v450 = vpop.f32.mrb[0].mxu0
        %451 = vmatprep.mubr.bf16.mxu0 0
        %452 = vmatmul.mubr.bf16.gmra.mrb[0].mxu0 %v362
        %v453 = vpop.f32.mrb[0].mxu0
        %v454 = vadd.f32 %v266, %v453
        %v455 = vpop.f32.mrb[0].mxu0
        %v456 = vpop.f32.mrb[0].mxu0
        %v457 = vadd.f32 %v266, %v456
        %v458 = vpop.f32.mrb[0].mxu0
        %459 = vmatprep.mubr.bf16.mxu0 0
        %460 = vmatmul.mubr.bf16.gmra.mrb[0].mxu0 %v365
        %v461 = vpop.f32.mrb[0].mxu0
        %v462 = vadd.f32 %v266, %v461
        %v463 = vpop.f32.mrb[0].mxu0
        %v464 = vpop.f32.mrb[0].mxu0
        %v465 = vadd.f32 %v266, %v464
        %v466 = vpop.f32.mrb[0].mxu0
        %467 = vmatprep.mubr.bf16.mxu0 0
        %468 = vmatmul.mubr.bf16.gmra.mrb[0].mxu0 %v368
        %v469 = vpop.f32.mrb[0].mxu0
        %v470 = vadd.f32 %v266, %v469
        %v471 = vpop.f32.mrb[0].mxu0
        %v472 = vpop.f32.mrb[0].mxu0
        %v473 = vadd.f32 %v266, %v472
        %v474 = vpop.f32.mrb[0].mxu0
        %475 = vmatprep.mubr.bf16.mxu0 0
        %476 = vmatmul.mubr.bf16.gmra.mrb[0].mxu0 %v371
        %v477 = vpop.f32.mrb[0].mxu0
        %v478 = vadd.f32 %v266, %v477
        %v479 = vpop.f32.mrb[0].mxu0
        %v480 = vpop.f32.mrb[0].mxu0
        %v481 = vadd.f32 %v266, %v480
        %v482 = vpop.f32.mrb[0].mxu0
        %483 = vmatprep.mubr.bf16.mxu0 0
        %484 = vmatmul.mubr.bf16.gmra.mrb[0].mxu0 %v374
        %v485 = vpop.f32.mrb[0].mxu0
        %v486 = vadd.f32 %v266, %v485
        %v487 = vpop.f32.mrb[0].mxu0
        %v488 = vpop.f32.mrb[0].mxu0
        %v489 = vadd.f32 %v266, %v488
        %v490 = vpop.f32.mrb[0].mxu0
        %491 = vmatprep.mubr.bf16.mxu0 0
        %492 = vmatmul.mubr.bf16.gmra.mrb[0].mxu0 %v377
        %v493 = vpop.f32.mrb[0].mxu0
        %v494 = vadd.f32 %v266, %v493
        %v495 = vpop.f32.mrb[0].mxu0
        %v496 = vpop.f32.mrb[0].mxu0
        %v497 = vadd.f32 %v266, %v496
        %v498 = vpop.f32.mrb[0].mxu0
        %499 = vmatprep.mubr.bf16.mxu0 0
        %500 = vmatmul.mubr.bf16.gmra.mrb[0].mxu0 %v380
        %v501 = vpop.f32.mrb[0].mxu0
        %v502 = vadd.f32 %v266, %v501
        %v503 = vpop.f32.mrb[0].mxu0
        %v504 = vpop.f32.mrb[0].mxu0
        %v505 = vadd.f32 %v266, %v504
        %v506 = vpop.f32.mrb[0].mxu0
        %507 = vmatprep.mubr.bf16.mxu0 0
        %508 = vmatmul.mubr.bf16.gmra.mrb[0].mxu0 %v383
        %v509 = vpop.f32.mrb[0].mxu0
        %v510 = vadd.f32 %v266, %v509
        %v511 = vpop.f32.mrb[0].mxu0
        %v512 = vpop.f32.mrb[0].mxu0
        %v513 = vadd.f32 %v266, %v512
        %v514 = vpop.f32.mrb[0].mxu0
        %515 = vmatprep.mubr.bf16.mxu0 0
        %516 = vmatmul.mubr.bf16.gmra.mrb[0].mxu0 %v386
        %v517 = vpop.f32.mrb[0].mxu0
        %v518 = vadd.f32 %v266, %v517
        %v519 = vpop.f32.mrb[0].mxu0
        %v520 = vpop.f32.mrb[0].mxu0
        %v521 = vadd.f32 %v266, %v520
        %v522 = vpop.f32.mrb[0].mxu0
        %523 = vmatprep.mubr.bf16.mxu0 0
        %524 = vmatmul.mubr.bf16.gmra.mrb[0].mxu0 %v389
        %v525 = vpop.f32.mrb[0].mxu0
        %v526 = vadd.f32 %v266, %v525
        %v527 = vpop.f32.mrb[0].mxu0
        %v528 = vpop.f32.mrb[0].mxu0
        %v529 = vadd.f32 %v266, %v528
        %v530 = vpop.f32.mrb[0].mxu0
        %531 = vmatprep.mubr.bf16.mxu0 0
        %532 = vmatmul.mubr.bf16.gmra.mrb[0].mxu0 %v392
        %v533 = vpop.f32.mrb[0].mxu0
        %v534 = vadd.f32 %v266, %v533
        %v535 = vpop.f32.mrb[0].mxu0
        %v536 = vpop.f32.mrb[0].mxu0
        %v537 = vadd.f32 %v266, %v536
        %v538 = vpop.f32.mrb[0].mxu0
        %539 = vmatprep.mubr.bf16.mxu0 0
        %540 = vmatmul.mubr.bf16.gmra.mrb[0].mxu0 %v395
        %v541 = vpop.f32.mrb[0].mxu0
        %v542 = vadd.f32 %v266, %v541
        %v543 = vpop.f32.mrb[0].mxu0
        %v544 = vpop.f32.mrb[0].mxu0
        %v545 = vadd.f32 %v266, %v544
        %v546 = vpop.f32.mrb[0].mxu0
        %547 = vmatprep.mubr.bf16.mxu0 0
        %548 = vmatmul.mubr.bf16.gmra.mrb[0].mxu0 %v398
        %v549 = vpop.f32.mrb[0].mxu0
        %v550 = vadd.f32 %v266, %v549
        %v551 = vpop.f32.mrb[0].mxu0
        %v552 = vpop.f32.mrb[0].mxu0
        %v553 = vadd.f32 %v266, %v552
        %v554 = vpop.f32.mrb[0].mxu0
        %555 = vmatprep.mubr.bf16.mxu0 0
        %556 = vmatmul.mubr.bf16.gmra.mrb[0].mxu0 %v401
        %v557 = vpop.f32.mrb[0].mxu0
        %v558 = vadd.f32 %v266, %v557
        %v559 = vpop.f32.mrb[0].mxu0
        %v560 = vpop.f32.mrb[0].mxu0
        %v561 = vadd.f32 %v266, %v560
        %v562 = vpop.f32.mrb[0].mxu0
        %563 = vdwg.mxu0
        %v564 = vmax.f32 %v438, 0.0
        %v565 = vmax.f32 %v441, 0.0
        %v566 = vmax.f32 %v446, 0.0
        %v567 = vmax.f32 %v449, 0.0
        %v568 = vmax.f32 %v454, 0.0
        %v569 = vmax.f32 %v457, 0.0
        %v570 = vmax.f32 %v462, 0.0
        %v571 = vmax.f32 %v465, 0.0
        %v572 = vmax.f32 %v470, 0.0
        %v573 = vmax.f32 %v473, 0.0
        %v574 = vmax.f32 %v478, 0.0
        %v575 = vmax.f32 %v481, 0.0
        %v576 = vmax.f32 %v486, 0.0
        %v577 = vmax.f32 %v489, 0.0
        %v578 = vmax.f32 %v494, 0.0
        %v579 = vmax.f32 %v497, 0.0
        %v580 = vmax.f32 %v502, 0.0
        %v581 = vmax.f32 %v505, 0.0
        %v582 = vmax.f32 %v510, 0.0
        %v583 = vmax.f32 %v513, 0.0
        %v584 = vmax.f32 %v518, 0.0
        %v585 = vmax.f32 %v521, 0.0
        %v586 = vmax.f32 %v526, 0.0
        %v587 = vmax.f32 %v529, 0.0
        %v588 = vmax.f32 %v534, 0.0
        %v589 = vmax.f32 %v537, 0.0
        %v590 = vmax.f32 %v542, 0.0
        %v591 = vmax.f32 %v545, 0.0
        %v592 = vmax.f32 %v550, 0.0
        %v593 = vmax.f32 %v553, 0.0
        %v594 = vmax.f32 %v558, 0.0
        %v595 = vmax.f32 %v561, 0.0
        %v596 = vpack.c.bf16 %v565, %v564
        %v597 = vpack.c.bf16 %v567, %v566
        %v598 = vpack.c.bf16 %v569, %v568
        %v599 = vpack.c.bf16 %v571, %v570
        %v600 = vpack.c.bf16 %v573, %v572
        %v601 = vpack.c.bf16 %v575, %v574
        %v602 = vpack.c.bf16 %v577, %v576
        %v603 = vpack.c.bf16 %v579, %v578
        %v604 = vpack.c.bf16 %v581, %v580
        %v605 = vpack.c.bf16 %v583, %v582
        %v606 = vpack.c.bf16 %v585, %v584
        %v607 = vpack.c.bf16 %v587, %v586
        %v608 = vpack.c.bf16 %v589, %v588
        %v609 = vpack.c.bf16 %v591, %v590
        %v610 = vpack.c.bf16 %v593, %v592
        %v611 = vpack.c.bf16 %v595, %v594
        %v612 = vld [vmem:[%s3] sm:$0xf]
        %v613 = vld [vmem:[%s3 + $0x4] sm:$0xf]
        %v614 = vld [vmem:[%s3 + $0x8] sm:$0xf]
        %v615 = vld [vmem:[%s3 + $0xc] sm:$0xf]
        %v616 = vld [vmem:[%s3 + $0x10] sm:$0xf]
        %v617 = vld [vmem:[%s3 + $0x14] sm:$0xf]
        %v618 = vld [vmem:[%s3 + $0x18] sm:$0xf]
        %v619 = vld [vmem:[%s3 + $0x1c] sm:$0xf]
        %v620 = vld [vmem:[%s3 + $0x20] sm:$0xf]
        %v621 = vld [vmem:[%s3 + $0x24] sm:$0xf]
        %v622 = vld [vmem:[%s3 + $0x28] sm:$0xf]
        %v623 = vld [vmem:[%s3 + $0x2c] sm:$0xf]
        %v624 = vld [vmem:[%s3 + $0x30] sm:$0xf]
        %v625 = vld [vmem:[%s3 + $0x34] sm:$0xf]
        %v626 = vld [vmem:[%s3 + $0x38] sm:$0xf]
        %v627 = vld [vmem:[%s3 + $0x3c] sm:$0xf]
        %v628 = vld [vmem:[%s4] sm:$0x1]
        %v630 = vlaneseq
        %v631 = vshrl.u32 %v630, 7
        %v632 = vsub.s32 0, %v631
        %v633 = vrot.slane %v628, %v632
        %v651 = vunpack.c.l.b16 %v612
        %v652 = vunpack.c.l.b16 %v613
        %v653 = vunpack.c.l.b16 %v614
        %v654 = vunpack.c.l.b16 %v615
        %v655 = vunpack.c.l.b16 %v616
        %v656 = vunpack.c.l.b16 %v617
        %v657 = vunpack.c.l.b16 %v618
        %v658 = vunpack.c.l.b16 %v619
        %v659 = vunpack.c.l.b16 %v620
        %v660 = vunpack.c.l.b16 %v621
        %v661 = vunpack.c.l.b16 %v622
        %v662 = vunpack.c.l.b16 %v623
        %v663 = vunpack.c.l.b16 %v624
        %v664 = vunpack.c.l.b16 %v625
        %v665 = vunpack.c.l.b16 %v626
        %v666 = vunpack.c.l.b16 %v627
        %v667 = vpack.c.b16 %v652, %v651
        %v668 = vpack.c.b16 %v654, %v653
        %v669 = vpack.c.b16 %v656, %v655
        %v670 = vpack.c.b16 %v658, %v657
        %v671 = vpack.c.b16 %v660, %v659
        %v672 = vpack.c.b16 %v662, %v661
        %v673 = vpack.c.b16 %v664, %v663
        %v674 = vpack.c.b16 %v666, %v665
        %683 = vmatprep.subr.bf16.mxu0 0
        %684 = vmatpush1.bf16.msra.mxu0 %v667
        %685 = vmatprep.subr.bf16.mxu0 0
        %686 = vmatpush1.bf16.msra.mxu0 %v668
        %687 = vmatprep.subr.bf16.mxu0 0
        %688 = vmatpush1.bf16.msra.mxu0 %v669
        %689 = vmatprep.subr.bf16.mxu0 0
        %690 = vmatpush1.bf16.msra.mxu0 %v670
        %691 = vmatprep.subr.bf16.mxu0 0
        %692 = vmatpush1.bf16.msra.mxu0 %v671
        %693 = vmatprep.subr.bf16.mxu0 0
        %694 = vmatpush1.bf16.msra.mxu0 %v672
        %695 = vmatprep.subr.bf16.mxu0 0
        %696 = vmatpush1.bf16.msra.mxu0 %v673
        %697 = vmatprep.subr.bf16.mxu0 0
        %698 = vmatpush1.bf16.msra.mxu0 %v674
        %699 = vmatprep.subr.bf16.mxu0 0
        %700 = vmatpush1.bf16.msra.mxu0 0
        %701 = vmatprep.subr.bf16.mxu0 0
        %702 = vmatpush1.bf16.msra.mxu0 0
        %703 = vmatprep.subr.bf16.mxu0 0
        %704 = vmatpush1.bf16.msra.mxu0 0
        %705 = vmatprep.subr.bf16.mxu0 0
        %706 = vmatpush1.bf16.msra.mxu0 0
        %707 = vmatprep.subr.bf16.mxu0 0
        %708 = vmatpush1.bf16.msra.mxu0 0
        %709 = vmatprep.subr.bf16.mxu0 0
        %710 = vmatpush1.bf16.msra.mxu0 0
        %711 = vmatprep.subr.bf16.mxu0 0
        %712 = vmatpush1.bf16.msra.mxu0 0
        %713 = vmatprep.subr.bf16.mxu0 0
        %714 = vmatpush1.bf16.msra.mxu0 0
        %715 = vmatprep.mubr.bf16.mxu0 0
        %716 = vmatmul.mubr.bf16.gmra.mrb[0].mxu0 %v596
        %v717 = vpop.f32.mrb[0].mxu0
        %v718 = vadd.f32 %v633, %v717
        %v719 = vpop.f32.mrb[0].mxu0
        %v720 = vpop.f32.mrb[0].mxu0
        %v721 = vadd.f32 %v633, %v720
        %v722 = vpop.f32.mrb[0].mxu0
        %723 = vmatprep.mubr.bf16.mxu0 0
        %724 = vmatmul.mubr.bf16.gmra.mrb[0].mxu0 %v597
        %v725 = vpop.f32.mrb[0].mxu0
        %v726 = vadd.f32 %v633, %v725
        %v727 = vpop.f32.mrb[0].mxu0
        %v728 = vpop.f32.mrb[0].mxu0
        %v729 = vadd.f32 %v633, %v728
        %v730 = vpop.f32.mrb[0].mxu0
        %731 = vmatprep.mubr.bf16.mxu0 0
        %732 = vmatmul.mubr.bf16.gmra.mrb[0].mxu0 %v598
        %v733 = vpop.f32.mrb[0].mxu0
        %v734 = vadd.f32 %v633, %v733
        %v735 = vpop.f32.mrb[0].mxu0
        %v736 = vpop.f32.mrb[0].mxu0
        %v737 = vadd.f32 %v633, %v736
        %v738 = vpop.f32.mrb[0].mxu0
        %739 = vmatprep.mubr.bf16.mxu0 0
        %740 = vmatmul.mubr.bf16.gmra.mrb[0].mxu0 %v599
        %v741 = vpop.f32.mrb[0].mxu0
        %v742 = vadd.f32 %v633, %v741
        %v743 = vpop.f32.mrb[0].mxu0
        %v744 = vpop.f32.mrb[0].mxu0
        %v745 = vadd.f32 %v633, %v744
        %v746 = vpop.f32.mrb[0].mxu0
        %747 = vmatprep.mubr.bf16.mxu0 0
        %748 = vmatmul.mubr.bf16.gmra.mrb[0].mxu0 %v600
        %v749 = vpop.f32.mrb[0].mxu0
        %v750 = vadd.f32 %v633, %v749
        %v751 = vpop.f32.mrb[0].mxu0
        %v752 = vpop.f32.mrb[0].mxu0
        %v753 = vadd.f32 %v633, %v752
        %v754 = vpop.f32.mrb[0].mxu0
        %755 = vmatprep.mubr.bf16.mxu0 0
        %756 = vmatmul.mubr.bf16.gmra.mrb[0].mxu0 %v601
        %v757 = vpop.f32.mrb[0].mxu0
        %v758 = vadd.f32 %v633, %v757
        %v759 = vpop.f32.mrb[0].mxu0
        %v760 = vpop.f32.mrb[0].mxu0
        %v761 = vadd.f32 %v633, %v760
        %v762 = vpop.f32.mrb[0].mxu0
        %763 = vmatprep.mubr.bf16.mxu0 0
        %764 = vmatmul.mubr.bf16.gmra.mrb[0].mxu0 %v602
        %v765 = vpop.f32.mrb[0].mxu0
        %v766 = vadd.f32 %v633, %v765
        %v767 = vpop.f32.mrb[0].mxu0
        %v768 = vpop.f32.mrb[0].mxu0
        %v769 = vadd.f32 %v633, %v768
        %v770 = vpop.f32.mrb[0].mxu0
        %771 = vmatprep.mubr.bf16.mxu0 0
        %772 = vmatmul.mubr.bf16.gmra.mrb[0].mxu0 %v603
        %v773 = vpop.f32.mrb[0].mxu0
        %v774 = vadd.f32 %v633, %v773
        %v775 = vpop.f32.mrb[0].mxu0
        %v776 = vpop.f32.mrb[0].mxu0
        %v777 = vadd.f32 %v633, %v776
        %v778 = vpop.f32.mrb[0].mxu0
        %779 = vmatprep.mubr.bf16.mxu0 0
        %780 = vmatmul.mubr.bf16.gmra.mrb[0].mxu0 %v604
        %v781 = vpop.f32.mrb[0].mxu0
        %v782 = vadd.f32 %v633, %v781
        %v783 = vpop.f32.mrb[0].mxu0
        %v784 = vpop.f32.mrb[0].mxu0
        %v785 = vadd.f32 %v633, %v784
        %v786 = vpop.f32.mrb[0].mxu0
        %787 = vmatprep.mubr.bf16.mxu0 0
        %788 = vmatmul.mubr.bf16.gmra.mrb[0].mxu0 %v605
        %v789 = vpop.f32.mrb[0].mxu0
        %v790 = vadd.f32 %v633, %v789
        %v791 = vpop.f32.mrb[0].mxu0
        %v792 = vpop.f32.mrb[0].mxu0
        %v793 = vadd.f32 %v633, %v792
        %v794 = vpop.f32.mrb[0].mxu0
        %795 = vmatprep.mubr.bf16.mxu0 0
        %796 = vmatmul.mubr.bf16.gmra.mrb[0].mxu0 %v606
        %v797 = vpop.f32.mrb[0].mxu0
        %v798 = vadd.f32 %v633, %v797
        %v799 = vpop.f32.mrb[0].mxu0
        %v800 = vpop.f32.mrb[0].mxu0
        %v801 = vadd.f32 %v633, %v800
        %v802 = vpop.f32.mrb[0].mxu0
        %803 = vmatprep.mubr.bf16.mxu0 0
        %804 = vmatmul.mubr.bf16.gmra.mrb[0].mxu0 %v607
        %v805 = vpop.f32.mrb[0].mxu0
        %v806 = vadd.f32 %v633, %v805
        %v807 = vpop.f32.mrb[0].mxu0
        %v808 = vpop.f32.mrb[0].mxu0
        %v809 = vadd.f32 %v633, %v808
        %v810 = vpop.f32.mrb[0].mxu0
        %811 = vmatprep.mubr.bf16.mxu0 0
        %812 = vmatmul.mubr.bf16.gmra.mrb[0].mxu0 %v608
        %v813 = vpop.f32.mrb[0].mxu0
        %v814 = vadd.f32 %v633, %v813
        %v815 = vpop.f32.mrb[0].mxu0
        %v816 = vpop.f32.mrb[0].mxu0
        %v817 = vadd.f32 %v633, %v816
        %v818 = vpop.f32.mrb[0].mxu0
        %819 = vmatprep.mubr.bf16.mxu0 0
        %820 = vmatmul.mubr.bf16.gmra.mrb[0].mxu0 %v609
        %v821 = vpop.f32.mrb[0].mxu0
        %v822 = vadd.f32 %v633, %v821
        %v823 = vpop.f32.mrb[0].mxu0
        %v824 = vpop.f32.mrb[0].mxu0
        %v825 = vadd.f32 %v633, %v824
        %v826 = vpop.f32.mrb[0].mxu0
        %827 = vmatprep.mubr.bf16.mxu0 0
        %828 = vmatmul.mubr.bf16.gmra.mrb[0].mxu0 %v610
        %v829 = vpop.f32.mrb[0].mxu0
        %v830 = vadd.f32 %v633, %v829
        %v831 = vpop.f32.mrb[0].mxu0
        %v832 = vpop.f32.mrb[0].mxu0
        %v833 = vadd.f32 %v633, %v832
        %v834 = vpop.f32.mrb[0].mxu0
        %835 = vmatprep.mubr.bf16.mxu0 0
        %836 = vmatmul.mubr.bf16.gmra.mrb[0].mxu0 %v611
        %v837 = vpop.f32.mrb[0].mxu0
        %v838 = vadd.f32 %v633, %v837
        %v839 = vpop.f32.mrb[0].mxu0
        %v840 = vpop.f32.mrb[0].mxu0
        %v841 = vadd.f32 %v633, %v840
        %v842 = vpop.f32.mrb[0].mxu0
        %843 = vdwg.mxu0
        %844 = vst [vmem:[%s218] sm:$0xff] %v718
        %845 = vst [vmem:[%s218 + $0x8] sm:$0xff] %v721
        %846 = vst [vmem:[%s218 + $0x10] sm:$0xff] %v726
        %847 = vst [vmem:[%s218 + $0x18] sm:$0xff] %v729
        %848 = vst [vmem:[%s218 + $0x20] sm:$0xff] %v734
        %849 = vst [vmem:[%s218 + $0x28] sm:$0xff] %v737
        %850 = vst [vmem:[%s218 + $0x30] sm:$0xff] %v742
        %851 = vst [vmem:[%s218 + $0x38] sm:$0xff] %v745
        %852 = vst [vmem:[%s218 + $0x40] sm:$0xff] %v750
        %853 = vst [vmem:[%s218 + $0x48] sm:$0xff] %v753
        %854 = vst [vmem:[%s218 + $0x50] sm:$0xff] %v758
        %855 = vst [vmem:[%s218 + $0x58] sm:$0xff] %v761
        %856 = vst [vmem:[%s218 + $0x60] sm:$0xff] %v766
        %857 = vst [vmem:[%s218 + $0x68] sm:$0xff] %v769
        %858 = vst [vmem:[%s218 + $0x70] sm:$0xff] %v774
        %859 = vst [vmem:[%s218 + $0x78] sm:$0xff] %v777
        %860 = vst [vmem:[%s218 + $0x80] sm:$0xff] %v782
        %861 = vst [vmem:[%s218 + $0x88] sm:$0xff] %v785
        %862 = vst [vmem:[%s218 + $0x90] sm:$0xff] %v790
        %863 = vst [vmem:[%s218 + $0x98] sm:$0xff] %v793
        %864 = vst [vmem:[%s218 + $0xa0] sm:$0xff] %v798
        %865 = vst [vmem:[%s218 + $0xa8] sm:$0xff] %v801
        %866 = vst [vmem:[%s218 + $0xb0] sm:$0xff] %v806
        %867 = vst [vmem:[%s218 + $0xb8] sm:$0xff] %v809
        %868 = vst [vmem:[%s218 + $0xc0] sm:$0xff] %v814
        %869 = vst [vmem:[%s218 + $0xc8] sm:$0xff] %v817
        %870 = vst [vmem:[%s218 + $0xd0] sm:$0xff] %v822
        %871 = vst [vmem:[%s218 + $0xd8] sm:$0xff] %v825
        %872 = vst [vmem:[%s218 + $0xe0] sm:$0xff] %v830
        %873 = vst [vmem:[%s218 + $0xe8] sm:$0xff] %v833
        %874 = vst [vmem:[%s218 + $0xf0] sm:$0xff] %v838
        %875 = vst [vmem:[%s218 + $0xf8] sm:$0xff] %v841
        %s876 = sand.u32 %s137, 1
        %s877 = scalar_lea.sflag [#allocation3], %s876
        %s878 = sand.u32 %s137, 1
        %s879 = smul.addr %s878, 256
        %s880 = scalar_lea.vmem [#allocation2], %s879
        // Predicated region
        $region41: #{tpu_custom_call.1} parent=39 // pred_check
          %p881 = pneg %p147
        $region42: #{tpu_custom_call.1} parent=39 // pred_check_branch
          %883 = sbr.rel (%p881) target = $region44
        $region43: #{tpu_custom_call.1} parent=39 // pred_region
          %s884 = smul.u32 32, %s19
          %s886 = ssub.s32 4096, 4096
          %887 = vsyncadd %s877, %s886
          %s888 = smul.addr %s884, 128
          %s889 = scalar_lea.hbm %s5, %s888
          %s890 = sshll.u32 %s880, 4
          %s891 = int_to_ptr.vmem [resolvable:$true] %s890
          %896 = dma.vmem_to_hbm [thread:$0]  %s891, 4096, %s889, %s877, 128, 128, 8
        $region44: #{tpu_custom_call.1} parent=39 // pred_fallthru
          _
      $region40: #{tpu_custom_call.1} parent=5 // pred_fallthru
        _
      %p897 = scmp.le.s32.totalorder 2, %s14
      // Predicated region
      $region45: #{tpu_custom_call.1} parent=5 // pred_check
        %p898 = pneg %p897
      $region46: #{tpu_custom_call.1} parent=5 // pred_check_branch
        %900 = sbr.rel (%p898) target = $region48
      $region47: #{tpu_custom_call.1} parent=5 // pred_region
        %s901 = ssub.s32 %s14, 2
        // Predicated region
        $region49: #{tpu_custom_call.1} parent=47 // pred_check
          %p902 = pneg %p153
        $region50: #{tpu_custom_call.1} parent=47 // pred_check_branch
          %904 = sbr.rel (%p902) target = $region52
        $region51: #{tpu_custom_call.1} parent=47 // pred_region
          %s905 = sand.u32 %s138, 1
          %s906 = scalar_lea.sflag [#allocation3], %s905
          %s907 = sand.u32 %s138, 1
          %s908 = smul.addr %s907, 256
          %s909 = scalar_lea.vmem [#allocation2], %s908
          %910 = dma.done %s906, 4096
        $region52: #{tpu_custom_call.1} parent=47 // pred_fallthru
          _
      $region48: #{tpu_custom_call.1} parent=5 // pred_fallthru
        _
    $region6: #{tpu_custom_call.1} parent=1 // loop_footer
      %s18 = sadd.s32 1, %s14
    $region7: #{tpu_custom_call.1} parent=1 // loop_footer_branch
      %13 = sbr.rel target = $region3
    $region8: #{tpu_custom_call.1} parent=1 // loop_exit
      _
    %911 = vsyncpa [#allocation3], 1
    %s912 = scalar_lea.sflag [#allocation3], 1
    %913 = vsyncpa %s912, 1

</llo_original>
